<compile_context>
chip_gen: v5e
topology: v5e:2x2
jax: 0.10.0
libtpu: 0.0.40
codegen_flags: <defaults>
</compile_context>

<pallas_src>
import functools

import jax
import jax.numpy as jnp
from jax import lax
from jax.experimental import pallas as pl
from jax.experimental.pallas import tpu as pltpu


# ----------------------------------------------------------------------------
# Kernel
# ----------------------------------------------------------------------------

def _vq_kernel(x_ref, ct_ref, chi_ref, clo_ref, c2_ref, kv_ref,
               q_ref, idx_ref, loss_ref, *, n_valid, loss_scale):
    t_idx = pl.program_id(1)
    tiles_per_core = pl.num_programs(1)
    tile_idx = pl.program_id(0) * tiles_per_core + t_idx
    tile_n = x_ref.shape[0]

    x = x_ref[...]                                      # (TILE_N, E), latent dtype
    x32 = x.astype(jnp.float32)
    xb = x.astype(jnp.bfloat16)

    # --- distances up to a per-row constant: d'[n,k] = |c_k|^2 - 2 x.c_k ----
    # Single bf16 MXU pass (rank order is all the argmin needs); the codebook is
    # passed pre-transposed (E, Kp) so this is a native NN contraction.
    xc = jnp.dot(xb, ct_ref[...], preferred_element_type=jnp.float32)   # (TILE_N, Kp)
    d = c2_ref[...] - 2.0 * xc                                          # f32, pads = +huge

    kp = d.shape[1]
    col = lax.broadcasted_iota(jnp.int32, d.shape, 1)
    d_min = jnp.min(d, axis=-1, keepdims=True)
    idx_col = jnp.min(jnp.where(d <= d_min, col, kp), axis=-1,
                      keepdims=True)                                    # first argmin
    onehot = (col == idx_col).astype(jnp.bfloat16)                      # exact 0/1

    # --- quantized = codebook[idx] via two single-pass bf16 matmuls ----------
    # codebook = c_hi + c_lo (bf16 hi/lo split); each dot gathers exactly one row,
    # so the gather matches the f32 codebook to ~2^-17 with 2 MXU passes.
    quant = (jnp.dot(onehot, chi_ref[...], preferred_element_type=jnp.float32)
             + jnp.dot(onehot, clo_ref[...], preferred_element_type=jnp.float32))
    q_ref[...] = quant.astype(q_ref.dtype)

    # --- lane-dense indices ---------------------------------------------------
    # kv_ref rows are [k % 256, k // 256] (both exactly representable in bf16), so a
    # default-precision pass is exact for any K <= 65536. Output is one (1, TILE_N)
    # int32 row per tile (no redundant sublane copies).
    parts = lax.dot_general(kv_ref[...], onehot, (((1,), (1,)), ((), ())),
                            preferred_element_type=jnp.float32)         # (2, TILE_N)
    idx_row = parts[0:1, :] + 256.0 * parts[1:2, :]
    idx_ref[0] = (idx_row + 0.5).astype(jnp.int32)

    # --- (1 + beta) * sum of squared errors, masked past the valid rows ------
    row = lax.broadcasted_iota(jnp.int32, (tile_n, 1), 0) + tile_idx * tile_n
    valid = (row < n_valid).astype(jnp.float32)
    diff = (x32 - quant) * valid
    sq = jnp.sum(diff * diff)

    @pl.when(t_idx == 0)
    def _init():
        loss_ref[...] = jnp.zeros_like(loss_ref)

    loss_ref[...] += sq

    @pl.when(t_idx == tiles_per_core - 1)
    def _finalize():
        loss_ref[...] = loss_ref[...] * loss_scale


# ----------------------------------------------------------------------------
# pallas_call builder + wrapper
# ----------------------------------------------------------------------------

def _round_up(x, m):
    return ((x + m - 1) // m) * m


def _choose_tile_n(n, e, kp, x_bytes):
    """Largest row tile (multiple of 128, <= 2048) whose working set stays ~20 MiB."""
    tile = min(2048, max(128, _round_up(n, 128)))

    def vmem_need(t):
        io = 2 * t * e * 2 * x_bytes + 2 * t * 4          # double-buffered x + q + idx
        interm = t * kp * 14 + t * e * 12                  # xc/d/col/onehot + quant/diff/x32
        resident = 2 * (3 * kp * e * 2 + kp * 4 + 2 * kp * 2)
        return io + interm + resident

    while tile > 128 and vmem_need(tile) > (20 << 20):
        tile = max(128, _round_up(tile // 2, 128))
    return tile


def _vq_pallas_call(n_pad, e, kp, tile_n, n_split, x_dtype, n_valid, loss_scale):
    num_tiles = n_pad // tile_n
    tiles_per_core = num_tiles // n_split
    kernel = functools.partial(_vq_kernel, n_valid=n_valid, loss_scale=loss_scale)

    def xmap(c, i):
        return (c * tiles_per_core + i, 0)

    def cmap(c, i):
        return (0, 0)

    # TODO(synk): for very large codebooks, single-buffer the resident codebook
    # blocks (pipeline_mode) or add a K grid axis to stay inside v7x's 64 MiB VMEM.
    return pl.pallas_call(
        kernel,
        grid=(n_split, tiles_per_core),
        in_specs=[
            pl.BlockSpec((tile_n, e), xmap),               # flat latents (streamed)
            pl.BlockSpec((e, kp), cmap),                   # codebook^T, bf16 (resident)
            pl.BlockSpec((kp, e), cmap),                   # codebook hi, bf16 (resident)
            pl.BlockSpec((kp, e), cmap),                   # codebook lo, bf16 (resident)
            pl.BlockSpec((1, kp), cmap),                   # |codebook|^2 (+huge on pads)
            pl.BlockSpec((2, kp), cmap),                   # [k % 256, k // 256], bf16
        ],
        out_specs=(
            pl.BlockSpec((tile_n, e), xmap),                                   # quantized
            pl.BlockSpec((1, 1, tile_n), lambda c, i: (c * tiles_per_core + i, 0, 0)),
            pl.BlockSpec((1, 1, 1), lambda c, i: (c, 0, 0)),                   # loss partial
        ),
        out_shape=(
            jax.ShapeDtypeStruct((n_pad, e), x_dtype),
            jax.ShapeDtypeStruct((num_tiles, 1, tile_n), jnp.int32),
            jax.ShapeDtypeStruct((n_split, 1, 1), jnp.float32),
        ),
        compiler_params=pltpu.CompilerParams(
            dimension_semantics=("parallel", "arbitrary"),
            vmem_limit_bytes=32 * 1024 * 1024),
    )


@functools.partial(jax.jit, static_argnames=("beta", "temperature"))
def vector_quantizer_forward(latent, codebook, *, beta, temperature=1.0):
    """Forward value of VectorQuantizer.forward (eval, no buffer mutation)."""
    del temperature  # argmax(softmax(-d/T)) == argmin(d): no effect on the forward value
    b, t, e = latent.shape
    k = codebook.shape[0]
    n = b * t

    kp = _round_up(k, 128)
    x_bytes = jnp.dtype(latent.dtype).itemsize
    tile_n = _choose_tile_n(n, e, kp, x_bytes)
    n_pad = _round_up(n, tile_n)
    num_tiles = n_pad // tile_n
    n_split = 2 if (num_tiles >= 2 and num_tiles % 2 == 0) else 1

    flat = latent.reshape(n, e)
    if n_pad != n:
        flat = jnp.pad(flat, ((0, n_pad - n), (0, 0)))

    cb = jnp.pad(codebook.astype(jnp.float32), ((0, kp - k), (0, 0)))
    ct = cb.T.astype(jnp.bfloat16)                       # (E, Kp) for the distance matmul
    c_hi = cb.astype(jnp.bfloat16)                       # (Kp, E) hi part for the gather
    c_lo = (cb - c_hi.astype(jnp.float32)).astype(jnp.bfloat16)
    c2 = jnp.sum(cb * cb, axis=1)
    c2 = jnp.where(jnp.arange(kp) < k, c2, jnp.float32(1e30)).reshape(1, kp)
    ks = jnp.arange(kp, dtype=jnp.int32)
    kv = jnp.stack([ks % 256, ks // 256]).astype(jnp.bfloat16)   # (2, Kp), bf16-exact

    loss_scale = float(1.0 + beta) / float(n * e)
    quant, idx, loss = _vq_pallas_call(
        n_pad, e, kp, tile_n, n_split, latent.dtype, n, loss_scale)(
        flat, ct, c_hi, c_lo, c2, kv)

    quantized = (quant[:n] if n_pad != n else quant).reshape(b, t, e)
    indices = idx.reshape(-1)[:n]
    total_loss = jnp.sum(loss)
    return quantized, total_loss, indices


def update_usage_count(usage_count, indices):
    # Functional form of `self.usage_count[indices] += 1` (plain JAX scatter-add).
    return usage_count.at[indices].add(1.0)


# TODO(synk): training-only EMA codebook/cluster-size update, temperature annealing and
# the in-place usage_count buffer mutation are module-state side effects, not part of the
# returned forward value; only the functional usage-count helper above is provided.


# ----------------------------------------------------------------------------
# Self-test
# ----------------------------------------------------------------------------

if __name__ == "__main__":
    key = jax.random.PRNGKey(0)
    BETA = 0.25

    def exact_distances(lat, cb):
        f = lat.reshape(-1, cb.shape[1]).astype(jnp.float32)
        cbf = cb.astype(jnp.float32)
        return (jnp.sum(f * f, axis=1, keepdims=True)
                - 2.0 * jnp.matmul(f, cbf.T, precision=lax.Precision.HIGHEST)
                + jnp.sum(cbf * cbf, axis=1))

    def check(lat, cb, beta, tag):
        q, loss, idx = vector_quantizer_forward(lat, cb, beta=beta)
        jax.block_until_ready((q, loss, idx))
        nrows = lat.shape[0] * lat.shape[1]
        assert q.shape == lat.shape, tag
        assert idx.shape == (nrows,), tag
        assert loss.shape == (), tag
        assert bool(jnp.all(jnp.isfinite(q))), tag
        assert bool(jnp.all((idx >= 0) & (idx < cb.shape[0]))), tag

        # (1) Chosen codes are (near-)nearest under exact f32 distances; the slack
        #     covers the single-pass bf16 distance matmul inside the kernel (exact
        #     index parity on float near-ties is not guaranteed and not required).
        d = exact_distances(lat, cb)
        d_pick = jnp.take_along_axis(d, idx[:, None], axis=1)[:, 0]
        gap = d_pick - jnp.min(d, axis=1)
        assert float(jnp.max(gap)) <= 0.15, (tag, float(jnp.max(gap)))

        # (2) quantized / loss are consistent with the returned indices.
        q_ref = cb.astype(jnp.float32)[idx].reshape(lat.shape)
        assert jnp.allclose(q.astype(jnp.float32), q_ref, atol=1e-5), tag
        loss_ref = (1.0 + beta) * jnp.mean((lat.astype(jnp.float32) - q_ref) ** 2)
        assert jnp.allclose(loss, loss_ref, rtol=1e-4, atol=1e-6), tag
        return idx

    # Small shape implied by the module: batch=2, seq=8, latent_dim=32, 16 codes.
    B, T, D, K = 2, 8, 32, 16
    k_lat, k_cb, k_lat2, k_lat3 = jax.random.split(key, 4)
    latent = jax.random.normal(k_lat, (B, T, D), jnp.float32)
    codebook = jax.random.uniform(k_cb, (K, D), jnp.float32, -1.0 / K, 1.0 / K)
    idx1 = check(latent, codebook, BETA, "small")

    # Ragged row count: exercises padding + masked-loss path.
    latent2 = jax.random.normal(k_lat2, (4, 100, D), jnp.float32)
    check(latent2, codebook, BETA, "ragged")

    # Multi-tile + parallel-split path: 4 tiles, 2 loss partials, no padding.
    latent3 = jax.random.normal(k_lat3, (8, 1024, D), jnp.float32)
    check(latent3, codebook, BETA, "large")

    usage = update_usage_count(jnp.zeros((K,), jnp.float32), idx1)
    assert float(usage.sum()) == float(B * T)

    print("KERNEL_OK")
</pallas_src>

<mosaic_0001>
module attributes {stable_mosaic.version = 11 : i64} {
  func.func @_vq_kernel(%arg0: i32, %arg1: i32, %arg2: memref<128x32xf32, #tpu.memory_space<vmem>>, %arg3: memref<32x128xbf16, #tpu.memory_space<vmem>>, %arg4: memref<128x32xbf16, #tpu.memory_space<vmem>>, %arg5: memref<128x32xbf16, #tpu.memory_space<vmem>>, %arg6: memref<1x128xf32, #tpu.memory_space<vmem>>, %arg7: memref<2x128xbf16, #tpu.memory_space<vmem>>, %arg8: memref<128x32xf32, #tpu.memory_space<vmem>>, %arg9: memref<1x1x128xi32, #tpu.memory_space<vmem>>, %arg10: memref<1x1x1xf32, #tpu.memory_space<vmem>>) attributes {dimension_semantics = [#tpu.dimension_semantics<parallel>, #tpu.dimension_semantics<arbitrary>], iteration_bounds = array<i64: 1, 1>, scalar_prefetch = 0 : i64, scratch_operands = 0 : i64, tpu.core_type = #tpu.core_type<tc>, window_params = [{transform_indices = @transform_0, window_bounds = array<i64: 128, 32>}, {pipeline_mode = #tpu.pipeline_mode<synchronous>, transform_indices = @transform_1, window_bounds = array<i64: 32, 128>}, {pipeline_mode = #tpu.pipeline_mode<synchronous>, transform_indices = @transform_2, window_bounds = array<i64: 128, 32>}, {pipeline_mode = #tpu.pipeline_mode<synchronous>, transform_indices = @transform_3, window_bounds = array<i64: 128, 32>}, {pipeline_mode = #tpu.pipeline_mode<synchronous>, transform_indices = @transform_4, window_bounds = array<i64: 1, 128>}, {pipeline_mode = #tpu.pipeline_mode<synchronous>, transform_indices = @transform_5, window_bounds = array<i64: 2, 128>}, {transform_indices = @transform_6, window_bounds = array<i64: 128, 32>}, {transform_indices = @transform_7, window_bounds = array<i64: 1, 1, 128>}, {transform_indices = @transform_8, window_bounds = array<i64: 1, 1, 1>}]} {
    %c1_i32 = arith.constant 1 : i32
    %0 = arith.muli %arg0, %c1_i32 : i32
    %1 = arith.addi %0, %arg1 : i32
    %c0 = arith.constant 0 : index
    %c0_0 = arith.constant 0 : index
    %2 = vector.load %arg2[%c0, %c0_0] : memref<128x32xf32, #tpu.memory_space<vmem>>, vector<128x32xf32>
    %3 = arith.truncf %2 : vector<128x32xf32> to vector<128x32xbf16>
    %c0_1 = arith.constant 0 : index
    %c0_2 = arith.constant 0 : index
    %4 = vector.load %arg3[%c0_1, %c0_2] : memref<32x128xbf16, #tpu.memory_space<vmem>>, vector<32x128xbf16>
    %cst = arith.constant dense<0.000000e+00> : vector<128x128xf32>
    %5 = tpu.matmul %3, %4, %cst {dimension_numbers = #tpu.dot_dimension_numbers<[1], [0], [0], [1], [0, 0, 1, 1], [], []>} : vector<128x32xbf16>, vector<32x128xbf16>, vector<128x128xf32> -> vector<128x128xf32>
    %c0_3 = arith.constant 0 : index
    %c0_4 = arith.constant 0 : index
    %6 = vector.load %arg6[%c0_3, %c0_4] : memref<1x128xf32, #tpu.memory_space<vmem>>, vector<1x128xf32>
    %cst_5 = arith.constant 2.000000e+00 : f32
    %7 = vector.broadcast %cst_5 : f32 to vector<128x128xf32>
    %8 = arith.mulf %7, %5 : vector<128x128xf32>
    %9 = vector.broadcast %6 : vector<1x128xf32> to vector<128x128xf32>
    %10 = arith.subf %9, %8 : vector<128x128xf32>
    %11 = tpu.iota {dimensions = array<i32: 1>} : vector<128x128xi32>
    %cst_6 = arith.constant dense<0x7F800000> : vector<128xf32>
    %12 = vector.multi_reduction <minimumf>, %10, %cst_6 [1] : vector<128x128xf32> to vector<128xf32>
    %13 = vector.shape_cast %12 : vector<128xf32> to vector<128x1xf32>
    %14 = vector.broadcast %13 : vector<128x1xf32> to vector<128x128xf32>
    %15 = arith.cmpf ole, %10, %14 : vector<128x128xf32>
    %c128_i32 = arith.constant 128 : i32
    %16 = vector.broadcast %c128_i32 : i32 to vector<128x128xi32>
    %17 = arith.select %15, %11, %16 : vector<128x128xi1>, vector<128x128xi32>
    %cst_7 = arith.constant dense<2147483647> : vector<128xi32>
    %18 = vector.multi_reduction <minsi>, %17, %cst_7 [1] : vector<128x128xi32> to vector<128xi32>
    %19 = vector.shape_cast %18 : vector<128xi32> to vector<128x1xi32>
    %20 = vector.broadcast %19 : vector<128x1xi32> to vector<128x128xi32>
    %21 = arith.cmpi eq, %11, %20 : vector<128x128xi32>
    %22 = arith.extui %21 : vector<128x128xi1> to vector<128x128xi32>
    %23 = arith.sitofp %22 : vector<128x128xi32> to vector<128x128xf32>
    %24 = arith.truncf %23 : vector<128x128xf32> to vector<128x128xbf16>
    %c0_8 = arith.constant 0 : index
    %c0_9 = arith.constant 0 : index
    %25 = vector.load %arg4[%c0_8, %c0_9] : memref<128x32xbf16, #tpu.memory_space<vmem>>, vector<128x32xbf16>
    %cst_10 = arith.constant dense<0.000000e+00> : vector<128x32xf32>
    %26 = tpu.matmul %24, %25, %cst_10 {dimension_numbers = #tpu.dot_dimension_numbers<[1], [0], [0], [1], [0, 0, 1, 1], [], []>} : vector<128x128xbf16>, vector<128x32xbf16>, vector<128x32xf32> -> vector<128x32xf32>
    %c0_11 = arith.constant 0 : index
    %c0_12 = arith.constant 0 : index
    %27 = vector.load %arg5[%c0_11, %c0_12] : memref<128x32xbf16, #tpu.memory_space<vmem>>, vector<128x32xbf16>
    %cst_13 = arith.constant dense<0.000000e+00> : vector<128x32xf32>
    %28 = tpu.matmul %24, %27, %cst_13 {dimension_numbers = #tpu.dot_dimension_numbers<[1], [0], [0], [1], [0, 0, 1, 1], [], []>} : vector<128x128xbf16>, vector<128x32xbf16>, vector<128x32xf32> -> vector<128x32xf32>
    %29 = arith.addf %26, %28 : vector<128x32xf32>
    %c0_14 = arith.constant 0 : index
    %c0_15 = arith.constant 0 : index
    %30 = vector.load %arg8[%c0_14, %c0_15] : memref<128x32xf32, #tpu.memory_space<vmem>>, vector<128x32xf32>
    tpu.vector_store %arg8[%c0_14, %c0_15], %29 {strides = array<i32>} : memref<128x32xf32, #tpu.memory_space<vmem>>, vector<128x32xf32>,
    %c0_16 = arith.constant 0 : index
    %c0_17 = arith.constant 0 : index
    %31 = vector.load %arg7[%c0_16, %c0_17] : memref<2x128xbf16, #tpu.memory_space<vmem>>, vector<2x128xbf16>
    %cst_18 = arith.constant dense<0.000000e+00> : vector<2x128xf32>
    %32 = tpu.matmul %31, %24, %cst_18 {dimension_numbers = #tpu.dot_dimension_numbers<[1], [1], [0], [0], [0, 0, 1, 0], [], []>} : vector<2x128xbf16>, vector<128x128xbf16>, vector<2x128xf32> -> vector<2x128xf32>
    %33 = vector.extract_strided_slice %32 {offsets = [0, 0], sizes = [1, 128], strides = [1, 1]} : vector<2x128xf32> to vector<1x128xf32>
    %34 = vector.extract_strided_slice %32 {offsets = [1, 0], sizes = [1, 128], strides = [1, 1]} : vector<2x128xf32> to vector<1x128xf32>
    %cst_19 = arith.constant 2.560000e+02 : f32
    %35 = vector.broadcast %cst_19 : f32 to vector<1x128xf32>
    %36 = arith.mulf %35, %34 : vector<1x128xf32>
    %37 = arith.addf %33, %36 : vector<1x128xf32>
    %cst_20 = arith.constant 5.000000e-01 : f32
    %38 = vector.broadcast %cst_20 : f32 to vector<1x128xf32>
    %39 = arith.addf %37, %38 : vector<1x128xf32>
    %40 = arith.fptosi %39 : vector<1x128xf32> to vector<1x128xi32>
    %c0_21 = arith.constant 0 : index
    %c0_22 = arith.constant 0 : index
    %c0_23 = arith.constant 0 : index
    %41 = vector.load %arg9[%c0_21, %c0_22, %c0_23] : memref<1x1x128xi32, #tpu.memory_space<vmem>>, vector<1x1x128xi32>
    %42 = vector.shape_cast %41 : vector<1x1x128xi32> to vector<1x128xi32>
    %43 = vector.shape_cast %40 : vector<1x128xi32> to vector<1x1x128xi32>
    tpu.vector_store %arg9[%c0_21, %c0_22, %c0_23], %43 {strides = array<i32>} : memref<1x1x128xi32, #tpu.memory_space<vmem>>, vector<1x1x128xi32>,
    %44 = tpu.iota {dimensions = array<i32: 0>} : vector<128x1xi32>
    %c128_i32_24 = arith.constant 128 : i32
    %45 = arith.muli %1, %c128_i32_24 : i32
    %46 = vector.broadcast %45 : i32 to vector<128x1xi32>
    %47 = arith.addi %44, %46 : vector<128x1xi32>
    %c16_i32 = arith.constant 16 : i32
    %48 = vector.broadcast %c16_i32 : i32 to vector<128x1xi32>
    %49 = arith.cmpi slt, %47, %48 : vector<128x1xi32>
    %50 = arith.extui %49 : vector<128x1xi1> to vector<128x1xi32>
    %51 = arith.sitofp %50 : vector<128x1xi32> to vector<128x1xf32>
    %52 = arith.subf %2, %29 : vector<128x32xf32>
    %53 = vector.broadcast %51 : vector<128x1xf32> to vector<128x32xf32>
    %54 = arith.mulf %52, %53 : vector<128x32xf32>
    %55 = arith.mulf %54, %54 : vector<128x32xf32>
    %56 = vector.shape_cast %55 : vector<128x32xf32> to vector<1x128x32xf32>
    %cst_25 = arith.constant dense<0.000000e+00> : vector<1xf32>
    %57 = vector.multi_reduction <add>, %56, %cst_25 [1, 2] : vector<1x128x32xf32> to vector<1xf32>
    %58 = vector.shape_cast %57 : vector<1xf32> to vector<1x1x1xf32>
    %59 = vector.extract %58[0, 0, 0] : f32 from vector<1x1x1xf32>
    %c0_i32 = arith.constant 0 : i32
    %60 = arith.cmpi eq, %arg1, %c0_i32 : i32
    %61 = arith.extui %60 : i1 to i32
    %c0_i32_26 = arith.constant 0 : i32
    %62 = arith.cmpi ne, %61, %c0_i32_26 : i32
    scf.if %62 {
      %cst_35 = arith.constant 0.000000e+00 : f32
      %70 = vector.broadcast %cst_35 : f32 to vector<1x1x1xf32>
      %c0_36 = arith.constant 0 : index
      %c0_37 = arith.constant 0 : index
      %c0_38 = arith.constant 0 : index
      %71 = vector.load %arg10[%c0_36, %c0_37, %c0_38] : memref<1x1x1xf32, #tpu.memory_space<vmem>>, vector<1x1x1xf32>
      tpu.vector_store %arg10[%c0_36, %c0_37, %c0_38], %70 {strides = array<i32>} : memref<1x1x1xf32, #tpu.memory_space<vmem>>, vector<1x1x1xf32>,
    } else {
    }
    %c0_27 = arith.constant 0 : index
    %c0_28 = arith.constant 0 : index
    %c0_29 = arith.constant 0 : index
    %63 = vector.load %arg10[%c0_27, %c0_28, %c0_29] : memref<1x1x1xf32, #tpu.memory_space<vmem>>, vector<1x1x1xf32>
    %64 = vector.broadcast %59 : f32 to vector<1x1x1xf32>
    %65 = arith.addf %63, %64 : vector<1x1x1xf32>
    %c0_30 = arith.constant 0 : index
    %c0_31 = arith.constant 0 : index
    %c0_32 = arith.constant 0 : index
    %66 = vector.load %arg10[%c0_30, %c0_31, %c0_32] : memref<1x1x1xf32, #tpu.memory_space<vmem>>, vector<1x1x1xf32>
    tpu.vector_store %arg10[%c0_30, %c0_31, %c0_32], %65 {strides = array<i32>} : memref<1x1x1xf32, #tpu.memory_space<vmem>>, vector<1x1x1xf32>,
    %c0_i32_33 = arith.constant 0 : i32
    %67 = arith.cmpi eq, %arg1, %c0_i32_33 : i32
    %68 = arith.extui %67 : i1 to i32
    %c0_i32_34 = arith.constant 0 : i32
    %69 = arith.cmpi ne, %68, %c0_i32_34 : i32
    scf.if %69 {
      %c0_35 = arith.constant 0 : index
      %c0_36 = arith.constant 0 : index
      %c0_37 = arith.constant 0 : index
      %70 = vector.load %arg10[%c0_35, %c0_36, %c0_37] : memref<1x1x1xf32, #tpu.memory_space<vmem>>, vector<1x1x1xf32>
      %cst_38 = arith.constant 0.00244140625 : f32
      %71 = vector.broadcast %cst_38 : f32 to vector<1x1x1xf32>
      %72 = arith.mulf %70, %71 : vector<1x1x1xf32>
      %c0_39 = arith.constant 0 : index
      %c0_40 = arith.constant 0 : index
      %c0_41 = arith.constant 0 : index
      %73 = vector.load %arg10[%c0_39, %c0_40, %c0_41] : memref<1x1x1xf32, #tpu.memory_space<vmem>>, vector<1x1x1xf32>
      tpu.vector_store %arg10[%c0_39, %c0_40, %c0_41], %72 {strides = array<i32>} : memref<1x1x1xf32, #tpu.memory_space<vmem>>, vector<1x1x1xf32>,
    } else {
    }
    return
  }
  func.func @transform_0(%arg0: i32, %arg1: i32) -> (i32, i32) {
    %c1_i32 = arith.constant 1 : i32
    %0 = arith.muli %arg0, %c1_i32 : i32
    %1 = arith.addi %0, %arg1 : i32
    %c0_i32 = arith.constant 0 : i32
    %c0_i32_0 = arith.constant 0 : i32
    return %1, %c0_i32 : i32, i32
  }
  func.func @transform_1(%arg0: i32, %arg1: i32) -> (i32, i32) {
    %c0_i32 = arith.constant 0 : i32
    %c0_i32_0 = arith.constant 0 : i32
    %c0_i32_1 = arith.constant 0 : i32
    return %c0_i32, %c0_i32_0 : i32, i32
  }
  func.func @transform_2(%arg0: i32, %arg1: i32) -> (i32, i32) {
    %c0_i32 = arith.constant 0 : i32
    %c0_i32_0 = arith.constant 0 : i32
    %c0_i32_1 = arith.constant 0 : i32
    return %c0_i32, %c0_i32_0 : i32, i32
  }
  func.func @transform_3(%arg0: i32, %arg1: i32) -> (i32, i32) {
    %c0_i32 = arith.constant 0 : i32
    %c0_i32_0 = arith.constant 0 : i32
    %c0_i32_1 = arith.constant 0 : i32
    return %c0_i32, %c0_i32_0 : i32, i32
  }
  func.func @transform_4(%arg0: i32, %arg1: i32) -> (i32, i32) {
    %c0_i32 = arith.constant 0 : i32
    %c0_i32_0 = arith.constant 0 : i32
    %c0_i32_1 = arith.constant 0 : i32
    return %c0_i32, %c0_i32_0 : i32, i32
  }
  func.func @transform_5(%arg0: i32, %arg1: i32) -> (i32, i32) {
    %c0_i32 = arith.constant 0 : i32
    %c0_i32_0 = arith.constant 0 : i32
    %c0_i32_1 = arith.constant 0 : i32
    return %c0_i32, %c0_i32_0 : i32, i32
  }
  func.func @transform_6(%arg0: i32, %arg1: i32) -> (i32, i32) {
    %c1_i32 = arith.constant 1 : i32
    %0 = arith.muli %arg0, %c1_i32 : i32
    %1 = arith.addi %0, %arg1 : i32
    %c0_i32 = arith.constant 0 : i32
    %c0_i32_0 = arith.constant 0 : i32
    return %1, %c0_i32 : i32, i32
  }
  func.func @transform_7(%arg0: i32, %arg1: i32) -> (i32, i32, i32) {
    %c1_i32 = arith.constant 1 : i32
    %0 = arith.muli %arg0, %c1_i32 : i32
    %1 = arith.addi %0, %arg1 : i32
    %c0_i32 = arith.constant 0 : i32
    %c0_i32_0 = arith.constant 0 : i32
    %c0_i32_1 = arith.constant 0 : i32
    return %1, %c0_i32, %c0_i32_0 : i32, i32, i32
  }
  func.func @transform_8(%arg0: i32, %arg1: i32) -> (i32, i32, i32) {
    %c0_i32 = arith.constant 0 : i32
    %c0_i32_0 = arith.constant 0 : i32
    %c0_i32_1 = arith.constant 0 : i32
    return %arg0, %c0_i32, %c0_i32_0 : i32, i32, i32
  }
}

</mosaic_0001>

<llo_original>
// kernel: vector_quantizer_forward.1
$region0: #{vector_quantizer_forward.1}
  #allocation0 [shape = 'u32[]', space=smem, size = 0x4, offset = 0x4, fixed_abs, tag = 'smem constant byte address 0x4 - core index']
  #allocation1 [shape = 'u32[72,128]{1,0:T(1,128)}', space=vmem, size = 0x9000, scoped, tag = 'internal scratch']
  %s0 = inlined_call_operand.vmem [shape: f32[128,32], index: 0, kind: input, shape index: {}]
  %s1 = inlined_call_operand.vmem [shape: bf16[32,128], index: 1, kind: input, shape index: {}]
  %s2 = inlined_call_operand.vmem [shape: bf16[128,32], index: 2, kind: input, shape index: {}]
  %s3 = inlined_call_operand.vmem [shape: bf16[128,32], index: 3, kind: input, shape index: {}]
  %s4 = inlined_call_operand.vmem [shape: f32[1,128], index: 4, kind: input, shape index: {}]
  %s5 = inlined_call_operand.vmem [shape: bf16[2,128], index: 5, kind: input, shape index: {}]
  %s6 = inlined_call_operand.vmem [shape: f32[128,32], index: 6, kind: output, shape index: {0}]
  %s7 = inlined_call_operand.vmem [shape: s32[1,1,128], index: 7, kind: output, shape index: {1}]
  %s8 = inlined_call_operand.hbm [shape: f32[1,1,1], index: 8, kind: output, shape index: {2}]
  %9 = xla_tuple %s6, %s7, %s8
  %s10 = sld [smem:[#allocation0]]
  $region58: #{vector_quantizer_forward.1} parent=0
    _
  %s12 = ssub.s32 1, %s10
  %s13 = scalar_select 0, %s12, %s10
  $region1: #{vector_quantizer_forward.1} parent=0
    #allocation2 [shape = 'u8[512]{0}', space=vmem, size = 0x400, scoped, tag = 'output window, operand 2, single buffered']
    #allocation3 [shape = 's32[1]{0}', space=sflag, size = 0x4, scoped, tag = 'scoped memory for vector_quantizer_forward.1']
    %14 = vsyncpa [#allocation3], 0
    // Predicated region
    $region2: #{vector_quantizer_forward.1} parent=1 // pred_check
      _
    $region3: #{vector_quantizer_forward.1} parent=1 // pred_check_branch
      %16 = sbr.rel (0) target = $region5
    $region4: #{vector_quantizer_forward.1} parent=1 // pred_region
      %s17 = sadd.s32 0, 0
      %s18 = smul.u32 16, %s17
      %p19 = scmp.lt.s32.totalorder %s18, 15
      %s20 = scalar_select %p19, %s18, 15
      %s21 = smul.addr %s20, 8
      %s22 = scalar_lea.vmem %s0, %s21
      %s23 = sadd.s32 0, 0
      %s24 = smul.u32 16, %s23
    $region5: #{vector_quantizer_forward.1} parent=1 // pred_fallthru
      _
    // Predicated region
    $region6: #{vector_quantizer_forward.1} parent=1 // pred_check
      _
    $region7: #{vector_quantizer_forward.1} parent=1 // pred_check_branch
      %26 = sbr.rel (0) target = $region9
    $region8: #{vector_quantizer_forward.1} parent=1 // pred_region
      _
    $region9: #{vector_quantizer_forward.1} parent=1 // pred_fallthru
      _
    // Predicated region
    $region10: #{vector_quantizer_forward.1} parent=1 // pred_check
      _
    $region11: #{vector_quantizer_forward.1} parent=1 // pred_check_branch
      %28 = sbr.rel (0) target = $region13
    $region12: #{vector_quantizer_forward.1} parent=1 // pred_region
      _
    $region13: #{vector_quantizer_forward.1} parent=1 // pred_fallthru
      _
    // Predicated region
    $region14: #{vector_quantizer_forward.1} parent=1 // pred_check
      _
    $region15: #{vector_quantizer_forward.1} parent=1 // pred_check_branch
      %30 = sbr.rel (0) target = $region17
    $region16: #{vector_quantizer_forward.1} parent=1 // pred_region
      _
    $region17: #{vector_quantizer_forward.1} parent=1 // pred_fallthru
      _
    // Predicated region
    $region18: #{vector_quantizer_forward.1} parent=1 // pred_check
      _
    $region19: #{vector_quantizer_forward.1} parent=1 // pred_check_branch
      %32 = sbr.rel (0) target = $region21
    $region20: #{vector_quantizer_forward.1} parent=1 // pred_region
      _
    $region21: #{vector_quantizer_forward.1} parent=1 // pred_fallthru
      _
    // Predicated region
    $region22: #{vector_quantizer_forward.1} parent=1 // pred_check
      _
    $region23: #{vector_quantizer_forward.1} parent=1 // pred_check_branch
      %34 = sbr.rel (0) target = $region25
    $region24: #{vector_quantizer_forward.1} parent=1 // pred_region
      _
    $region25: #{vector_quantizer_forward.1} parent=1 // pred_fallthru
      _
    %s35 = sadd.s32 0, 0
    %s36 = smul.u32 16, %s35
    %p37 = scmp.lt.s32.totalorder %s36, 15
    %s38 = scalar_select %p37, %s36, 15
    %s39 = smul.addr %s38, 8
    %s40 = scalar_lea.vmem %s0, %s39
    %s41 = sadd.s32 0, 0
    %s42 = smul.u32 16, %s41
    %p43 = scmp.lt.s32.totalorder %s42, 15
    %s44 = scalar_select %p43, %s42, 15
    %s45 = smul.addr %s44, 8
    %s46 = scalar_lea.vmem %s6, %s45
    %s47 = sadd.s32 0, 0
    %p48 = scmp.lt.s32.totalorder %s47, 0
    %s49 = scalar_select %p48, %s47, 0
    %s50 = scalar_lea.vmem %s7, %s49
    %s51 = sadd.s32 0, 0
    %s52 = smul.u32 16, %s51
    %p53 = scmp.lt.s32.totalorder %s52, 15
    %s54 = scalar_select %p53, %s52, 15
    %s55 = smul.addr %s54, 8
    %s56 = scalar_lea.vmem %s0, %s55
    %s57 = sadd.s32 0, 0
    %s58 = smul.u32 16, %s57
    %s59 = sadd.s32 0, 0
    %s60 = smul.u32 16, %s59
    %p61 = scmp.lt.s32.totalorder %s60, 15
    %s62 = scalar_select %p61, %s60, 15
    %s63 = smul.addr %s62, 8
    %s64 = scalar_lea.vmem %s6, %s63
    %s65 = sadd.s32 0, 0
    %s66 = smul.u32 16, %s65
    %s67 = sadd.s32 0, 0
    %p68 = scmp.lt.s32.totalorder %s67, 0
    %s69 = scalar_select %p68, %s67, 0
    %s70 = scalar_lea.vmem %s7, %s69
    %s71 = sadd.s32 0, 0
    %s73 = sadd.s32 0, 0
    %v74 = vld [vmem:[%s56] sm:$0xff]
    %v75 = vld [vmem:[%s56 + $0x8] sm:$0xff]
    %v76 = vld [vmem:[%s56 + $0x10] sm:$0xff]
    %v77 = vld [vmem:[%s56 + $0x18] sm:$0xff]
    %v78 = vld [vmem:[%s56 + $0x20] sm:$0xff]
    %v79 = vld [vmem:[%s56 + $0x28] sm:$0xff]
    %v80 = vld [vmem:[%s56 + $0x30] sm:$0xff]
    %v81 = vld [vmem:[%s56 + $0x38] sm:$0xff]
    %v82 = vld [vmem:[%s56 + $0x40] sm:$0xff]
    %v83 = vld [vmem:[%s56 + $0x48] sm:$0xff]
    %v84 = vld [vmem:[%s56 + $0x50] sm:$0xff]
    %v85 = vld [vmem:[%s56 + $0x58] sm:$0xff]
    %v86 = vld [vmem:[%s56 + $0x60] sm:$0xff]
    %v87 = vld [vmem:[%s56 + $0x68] sm:$0xff]
    %v88 = vld [vmem:[%s56 + $0x70] sm:$0xff]
    %v89 = vld [vmem:[%s56 + $0x78] sm:$0xff]
    %v90 = vpack.c.bf16 %v75, %v74
    %v91 = vpack.c.bf16 %v77, %v76
    %v92 = vpack.c.bf16 %v79, %v78
    %v93 = vpack.c.bf16 %v81, %v80
    %v94 = vpack.c.bf16 %v83, %v82
    %v95 = vpack.c.bf16 %v85, %v84
    %v96 = vpack.c.bf16 %v87, %v86
    %v97 = vpack.c.bf16 %v89, %v88
    %v98 = vld [vmem:[%s1] sm:$0xf]
    %v99 = vld [vmem:[%s1 + $0x4] sm:$0xf]
    %v100 = vld [vmem:[%s1 + $0x8] sm:$0xf]
    %v101 = vld [vmem:[%s1 + $0xc] sm:$0xf]
    %v106 = vunpack.c.l.b16 %v98
    %v107 = vunpack.c.l.b16 %v99
    %v108 = vunpack.c.l.b16 %v100
    %v109 = vunpack.c.l.b16 %v101
    %v110 = vpack.c.b16 %v107, %v106
    %v111 = vpack.c.b16 %v109, %v108
    %vm114 = vcmask 261120
    %v116 = vsel %vm114, %v90, 0
    %v119 = vsel %vm114, %v91, 0
    %v122 = vsel %vm114, %v92, 0
    %v125 = vsel %vm114, %v93, 0
    %v128 = vsel %vm114, %v94, 0
    %v131 = vsel %vm114, %v95, 0
    %v134 = vsel %vm114, %v96, 0
    %v137 = vsel %vm114, %v97, 0
    %139 = vmatpush.bf16.msra.mxu0 0
    %140 = vmatpush.bf16.msra.mxu0 0
    %141 = vmatpush.bf16.msra.mxu0 0
    %142 = vmatpush.bf16.msra.mxu0 0
    %143 = vmatpush.bf16.msra.mxu0 0
    %144 = vmatpush.bf16.msra.mxu0 0
    %145 = vmatpush.bf16.msra.mxu0 %v111
    %146 = vmatpush.bf16.msra.mxu0 %v110
    %147 = vmatmul.bf16.gmra.mxu0 %v116
    %v148 = vpop.f32.mrf.mxu0
    %v149 = vadd.f32 0.0, %v148
    %v150 = vpop.f32.mrf.mxu0
    %v151 = vadd.f32 0.0, %v150
    %152 = vmatmul.bf16.gmra.mxu0 %v119
    %v153 = vpop.f32.mrf.mxu0
    %v154 = vadd.f32 0.0, %v153
    %v155 = vpop.f32.mrf.mxu0
    %v156 = vadd.f32 0.0, %v155
    %157 = vmatmul.bf16.gmra.mxu0 %v122
    %v158 = vpop.f32.mrf.mxu0
    %v159 = vadd.f32 0.0, %v158
    %v160 = vpop.f32.mrf.mxu0
    %v161 = vadd.f32 0.0, %v160
    %162 = vmatmul.bf16.gmra.mxu0 %v125
    %v163 = vpop.f32.mrf.mxu0
    %v164 = vadd.f32 0.0, %v163
    %v165 = vpop.f32.mrf.mxu0
    %v166 = vadd.f32 0.0, %v165
    %167 = vmatmul.bf16.gmra.mxu0 %v128
    %v168 = vpop.f32.mrf.mxu0
    %v169 = vadd.f32 0.0, %v168
    %v170 = vpop.f32.mrf.mxu0
    %v171 = vadd.f32 0.0, %v170
    %172 = vmatmul.bf16.gmra.mxu0 %v131
    %v173 = vpop.f32.mrf.mxu0
    %v174 = vadd.f32 0.0, %v173
    %v175 = vpop.f32.mrf.mxu0
    %v176 = vadd.f32 0.0, %v175
    %177 = vmatmul.bf16.gmra.mxu0 %v134
    %v178 = vpop.f32.mrf.mxu0
    %v179 = vadd.f32 0.0, %v178
    %v180 = vpop.f32.mrf.mxu0
    %v181 = vadd.f32 0.0, %v180
    %182 = vmatmul.bf16.gmra.mxu0 %v137
    %v183 = vpop.f32.mrf.mxu0
    %v184 = vadd.f32 0.0, %v183
    %v185 = vpop.f32.mrf.mxu0
    %v186 = vadd.f32 0.0, %v185
    %187 = vdwg.mxu0
    %v188 = vld [vmem:[%s4] sm:$0x1]
    %v189 = vmul.f32 %v149, 2.0
    %v190 = vmul.f32 %v151, 2.0
    %v191 = vmul.f32 %v154, 2.0
    %v192 = vmul.f32 %v156, 2.0
    %v193 = vmul.f32 %v159, 2.0
    %v194 = vmul.f32 %v161, 2.0
    %v195 = vmul.f32 %v164, 2.0
    %v196 = vmul.f32 %v166, 2.0
    %v197 = vmul.f32 %v169, 2.0
    %v198 = vmul.f32 %v171, 2.0
    %v199 = vmul.f32 %v174, 2.0
    %v200 = vmul.f32 %v176, 2.0
    %v201 = vmul.f32 %v179, 2.0
    %v202 = vmul.f32 %v181, 2.0
    %v203 = vmul.f32 %v184, 2.0
    %v204 = vmul.f32 %v186, 2.0
    %v206 = vperm.slane %v188, 0
    %v208 = vsub.f32 %v206, %v189
    %v209 = vsub.f32 %v206, %v190
    %v210 = vsub.f32 %v206, %v191
    %v211 = vsub.f32 %v206, %v192
    %v212 = vsub.f32 %v206, %v193
    %v213 = vsub.f32 %v206, %v194
    %v214 = vsub.f32 %v206, %v195
    %v215 = vsub.f32 %v206, %v196
    %v216 = vsub.f32 %v206, %v197
    %v217 = vsub.f32 %v206, %v198
    %v218 = vsub.f32 %v206, %v199
    %v219 = vsub.f32 %v206, %v200
    %v220 = vsub.f32 %v206, %v201
    %v221 = vsub.f32 %v206, %v202
    %v222 = vsub.f32 %v206, %v203
    %v223 = vsub.f32 %v206, %v204
    %v224 = vlaneseq
    %v225 = vand.u32 %v224, 127
    %226 = vmin.xlane.f32.xlu0 %v208
    %v227 = vpop.xlane.xlu0 %226
    %228 = vmin.xlane.f32.xlu0 %v209
    %v229 = vpop.xlane.xlu0 %228
    %230 = vmin.xlane.f32.xlu0 %v210
    %v231 = vpop.xlane.xlu0 %230
    %232 = vmin.xlane.f32.xlu0 %v211
    %v233 = vpop.xlane.xlu0 %232
    %234 = vmin.xlane.f32.xlu0 %v212
    %v235 = vpop.xlane.xlu0 %234
    %236 = vmin.xlane.f32.xlu0 %v213
    %v237 = vpop.xlane.xlu0 %236
    %238 = vmin.xlane.f32.xlu0 %v214
    %v239 = vpop.xlane.xlu0 %238
    %240 = vmin.xlane.f32.xlu0 %v215
    %v241 = vpop.xlane.xlu0 %240
    %242 = vmin.xlane.f32.xlu0 %v216
    %v243 = vpop.xlane.xlu0 %242
    %244 = vmin.xlane.f32.xlu0 %v217
    %v245 = vpop.xlane.xlu0 %244
    %246 = vmin.xlane.f32.xlu0 %v218
    %v247 = vpop.xlane.xlu0 %246
    %248 = vmin.xlane.f32.xlu0 %v219
    %v249 = vpop.xlane.xlu0 %248
    %250 = vmin.xlane.f32.xlu0 %v220
    %v251 = vpop.xlane.xlu0 %250
    %252 = vmin.xlane.f32.xlu0 %v221
    %v253 = vpop.xlane.xlu0 %252
    %254 = vmin.xlane.f32.xlu0 %v222
    %v255 = vpop.xlane.xlu0 %254
    %256 = vmin.xlane.f32.xlu0 %v223
    %v257 = vpop.xlane.xlu0 %256
    %vm258 = vcmp.le.f32.partialorder %v208, %v227
    %vm259 = vcmp.le.f32.partialorder %v209, %v229
    %vm260 = vcmp.le.f32.partialorder %v210, %v231
    %vm261 = vcmp.le.f32.partialorder %v211, %v233
    %vm262 = vcmp.le.f32.partialorder %v212, %v235
    %vm263 = vcmp.le.f32.partialorder %v213, %v237
    %vm264 = vcmp.le.f32.partialorder %v214, %v239
    %vm265 = vcmp.le.f32.partialorder %v215, %v241
    %vm266 = vcmp.le.f32.partialorder %v216, %v243
    %vm267 = vcmp.le.f32.partialorder %v217, %v245
    %vm268 = vcmp.le.f32.partialorder %v218, %v247
    %vm269 = vcmp.le.f32.partialorder %v219, %v249
    %vm270 = vcmp.le.f32.partialorder %v220, %v251
    %vm271 = vcmp.le.f32.partialorder %v221, %v253
    %vm272 = vcmp.le.f32.partialorder %v222, %v255
    %vm273 = vcmp.le.f32.partialorder %v223, %v257
    %v274 = vsel %vm258, %v225, 128
    %v275 = vsel %vm259, %v225, 128
    %v276 = vsel %vm260, %v225, 128
    %v277 = vsel %vm261, %v225, 128
    %v278 = vsel %vm262, %v225, 128
    %v279 = vsel %vm263, %v225, 128
    %v280 = vsel %vm264, %v225, 128
    %v281 = vsel %vm265, %v225, 128
    %v282 = vsel %vm266, %v225, 128
    %v283 = vsel %vm267, %v225, 128
    %v284 = vsel %vm268, %v225, 128
    %v285 = vsel %vm269, %v225, 128
    %v286 = vsel %vm270, %v225, 128
    %v287 = vsel %vm271, %v225, 128
    %v288 = vsel %vm272, %v225, 128
    %v289 = vsel %vm273, %v225, 128
    %v290 = vand.u32 %v274, 65535
    %v291 = vshra.s32 %v274, 16
    %v292 = vcvt.s32.f32 %v290
    %v293 = vcvt.s32.f32 %v291
    %294 = vmin.xlane.f32.xlu0 %v293
    %v295 = vpop.xlane.xlu0 %294
    %vm296 = vcmp.eq.f32.partialorder %v293, %v295
    %v297 = vsel %vm296, %v292, inf
    %298 = vmin.xlane.f32.xlu0 %v297
    %v299 = vpop.xlane.xlu0 %298
    %v300 = vcvt.f32.s32 %v299
    %v301 = vcvt.f32.s32 %v295
    %v302 = vshll.u32 %v301, 16
    %v303 = vadd.s32 %v302, %v300
    %v304 = vand.u32 %v275, 65535
    %v305 = vshra.s32 %v275, 16
    %v306 = vcvt.s32.f32 %v304
    %v307 = vcvt.s32.f32 %v305
    %308 = vmin.xlane.f32.xlu0 %v307
    %v309 = vpop.xlane.xlu0 %308
    %vm310 = vcmp.eq.f32.partialorder %v307, %v309
    %v311 = vsel %vm310, %v306, inf
    %312 = vmin.xlane.f32.xlu0 %v311
    %v313 = vpop.xlane.xlu0 %312
    %v314 = vcvt.f32.s32 %v313
    %v315 = vcvt.f32.s32 %v309
    %v316 = vshll.u32 %v315, 16
    %v317 = vadd.s32 %v316, %v314
    %v318 = vand.u32 %v276, 65535
    %v319 = vshra.s32 %v276, 16
    %v320 = vcvt.s32.f32 %v318
    %v321 = vcvt.s32.f32 %v319
    %322 = vmin.xlane.f32.xlu0 %v321
    %v323 = vpop.xlane.xlu0 %322
    %vm324 = vcmp.eq.f32.partialorder %v321, %v323
    %v325 = vsel %vm324, %v320, inf
    %326 = vmin.xlane.f32.xlu0 %v325
    %v327 = vpop.xlane.xlu0 %326
    %v328 = vcvt.f32.s32 %v327
    %v329 = vcvt.f32.s32 %v323
    %v330 = vshll.u32 %v329, 16
    %v331 = vadd.s32 %v330, %v328
    %v332 = vand.u32 %v277, 65535
    %v333 = vshra.s32 %v277, 16
    %v334 = vcvt.s32.f32 %v332
    %v335 = vcvt.s32.f32 %v333
    %336 = vmin.xlane.f32.xlu0 %v335
    %v337 = vpop.xlane.xlu0 %336
    %vm338 = vcmp.eq.f32.partialorder %v335, %v337
    %v339 = vsel %vm338, %v334, inf
    %340 = vmin.xlane.f32.xlu0 %v339
    %v341 = vpop.xlane.xlu0 %340
    %v342 = vcvt.f32.s32 %v341
    %v343 = vcvt.f32.s32 %v337
    %v344 = vshll.u32 %v343, 16
    %v345 = vadd.s32 %v344, %v342
    %v346 = vand.u32 %v278, 65535
    %v347 = vshra.s32 %v278, 16
    %v348 = vcvt.s32.f32 %v346
    %v349 = vcvt.s32.f32 %v347
    %350 = vmin.xlane.f32.xlu0 %v349
    %v351 = vpop.xlane.xlu0 %350
    %vm352 = vcmp.eq.f32.partialorder %v349, %v351
    %v353 = vsel %vm352, %v348, inf
    %354 = vmin.xlane.f32.xlu0 %v353
    %v355 = vpop.xlane.xlu0 %354
    %v356 = vcvt.f32.s32 %v355
    %v357 = vcvt.f32.s32 %v351
    %v358 = vshll.u32 %v357, 16
    %v359 = vadd.s32 %v358, %v356
    %v360 = vand.u32 %v279, 65535
    %v361 = vshra.s32 %v279, 16
    %v362 = vcvt.s32.f32 %v360
    %v363 = vcvt.s32.f32 %v361
    %364 = vmin.xlane.f32.xlu0 %v363
    %v365 = vpop.xlane.xlu0 %364
    %vm366 = vcmp.eq.f32.partialorder %v363, %v365
    %v367 = vsel %vm366, %v362, inf
    %368 = vmin.xlane.f32.xlu0 %v367
    %v369 = vpop.xlane.xlu0 %368
    %v370 = vcvt.f32.s32 %v369
    %v371 = vcvt.f32.s32 %v365
    %v372 = vshll.u32 %v371, 16
    %v373 = vadd.s32 %v372, %v370
    %v374 = vand.u32 %v280, 65535
    %v375 = vshra.s32 %v280, 16
    %v376 = vcvt.s32.f32 %v374
    %v377 = vcvt.s32.f32 %v375
    %378 = vmin.xlane.f32.xlu0 %v377
    %v379 = vpop.xlane.xlu0 %378
    %vm380 = vcmp.eq.f32.partialorder %v377, %v379
    %v381 = vsel %vm380, %v376, inf
    %382 = vmin.xlane.f32.xlu0 %v381
    %v383 = vpop.xlane.xlu0 %382
    %v384 = vcvt.f32.s32 %v383
    %v385 = vcvt.f32.s32 %v379
    %v386 = vshll.u32 %v385, 16
    %v387 = vadd.s32 %v386, %v384
    %v388 = vand.u32 %v281, 65535
    %v389 = vshra.s32 %v281, 16
    %v390 = vcvt.s32.f32 %v388
    %v391 = vcvt.s32.f32 %v389
    %392 = vmin.xlane.f32.xlu0 %v391
    %v393 = vpop.xlane.xlu0 %392
    %vm394 = vcmp.eq.f32.partialorder %v391, %v393
    %v395 = vsel %vm394, %v390, inf
    %396 = vmin.xlane.f32.xlu0 %v395
    %v397 = vpop.xlane.xlu0 %396
    %v398 = vcvt.f32.s32 %v397
    %v399 = vcvt.f32.s32 %v393
    %v400 = vshll.u32 %v399, 16
    %v401 = vadd.s32 %v400, %v398
    %v402 = vand.u32 %v282, 65535
    %v403 = vshra.s32 %v282, 16
    %v404 = vcvt.s32.f32 %v402
    %v405 = vcvt.s32.f32 %v403
    %406 = vmin.xlane.f32.xlu0 %v405
    %v407 = vpop.xlane.xlu0 %406
    %vm408 = vcmp.eq.f32.partialorder %v405, %v407
    %v409 = vsel %vm408, %v404, inf
    %410 = vmin.xlane.f32.xlu0 %v409
    %v411 = vpop.xlane.xlu0 %410
    %v412 = vcvt.f32.s32 %v411
    %v413 = vcvt.f32.s32 %v407
    %v414 = vshll.u32 %v413, 16
    %v415 = vadd.s32 %v414, %v412
    %v416 = vand.u32 %v283, 65535
    %v417 = vshra.s32 %v283, 16
    %v418 = vcvt.s32.f32 %v416
    %v419 = vcvt.s32.f32 %v417
    %420 = vmin.xlane.f32.xlu0 %v419
    %v421 = vpop.xlane.xlu0 %420
    %vm422 = vcmp.eq.f32.partialorder %v419, %v421
    %v423 = vsel %vm422, %v418, inf
    %424 = vmin.xlane.f32.xlu0 %v423
    %v425 = vpop.xlane.xlu0 %424
    %v426 = vcvt.f32.s32 %v425
    %v427 = vcvt.f32.s32 %v421
    %v428 = vshll.u32 %v427, 16
    %v429 = vadd.s32 %v428, %v426
    %v430 = vand.u32 %v284, 65535
    %v431 = vshra.s32 %v284, 16
    %v432 = vcvt.s32.f32 %v430
    %v433 = vcvt.s32.f32 %v431
    %434 = vmin.xlane.f32.xlu0 %v433
    %v435 = vpop.xlane.xlu0 %434
    %vm436 = vcmp.eq.f32.partialorder %v433, %v435
    %v437 = vsel %vm436, %v432, inf
    %438 = vmin.xlane.f32.xlu0 %v437
    %v439 = vpop.xlane.xlu0 %438
    %v440 = vcvt.f32.s32 %v439
    %v441 = vcvt.f32.s32 %v435
    %v442 = vshll.u32 %v441, 16
    %v443 = vadd.s32 %v442, %v440
    %v444 = vand.u32 %v285, 65535
    %v445 = vshra.s32 %v285, 16
    %v446 = vcvt.s32.f32 %v444
    %v447 = vcvt.s32.f32 %v445
    %448 = vmin.xlane.f32.xlu0 %v447
    %v449 = vpop.xlane.xlu0 %448
    %vm450 = vcmp.eq.f32.partialorder %v447, %v449
    %v451 = vsel %vm450, %v446, inf
    %452 = vmin.xlane.f32.xlu0 %v451
    %v453 = vpop.xlane.xlu0 %452
    %v454 = vcvt.f32.s32 %v453
    %v455 = vcvt.f32.s32 %v449
    %v456 = vshll.u32 %v455, 16
    %v457 = vadd.s32 %v456, %v454
    %v458 = vand.u32 %v286, 65535
    %v459 = vshra.s32 %v286, 16
    %v460 = vcvt.s32.f32 %v458
    %v461 = vcvt.s32.f32 %v459
    %462 = vmin.xlane.f32.xlu0 %v461
    %v463 = vpop.xlane.xlu0 %462
    %vm464 = vcmp.eq.f32.partialorder %v461, %v463
    %v465 = vsel %vm464, %v460, inf
    %466 = vmin.xlane.f32.xlu0 %v465
    %v467 = vpop.xlane.xlu0 %466
    %v468 = vcvt.f32.s32 %v467
    %v469 = vcvt.f32.s32 %v463
    %v470 = vshll.u32 %v469, 16
    %v471 = vadd.s32 %v470, %v468
    %v472 = vand.u32 %v287, 65535
    %v473 = vshra.s32 %v287, 16
    %v474 = vcvt.s32.f32 %v472
    %v475 = vcvt.s32.f32 %v473
    %476 = vmin.xlane.f32.xlu0 %v475
    %v477 = vpop.xlane.xlu0 %476
    %vm478 = vcmp.eq.f32.partialorder %v475, %v477
    %v479 = vsel %vm478, %v474, inf
    %480 = vmin.xlane.f32.xlu0 %v479
    %v481 = vpop.xlane.xlu0 %480
    %v482 = vcvt.f32.s32 %v481
    %v483 = vcvt.f32.s32 %v477
    %v484 = vshll.u32 %v483, 16
    %v485 = vadd.s32 %v484, %v482
    %v486 = vand.u32 %v288, 65535
    %v487 = vshra.s32 %v288, 16
    %v488 = vcvt.s32.f32 %v486
    %v489 = vcvt.s32.f32 %v487
    %490 = vmin.xlane.f32.xlu0 %v489
    %v491 = vpop.xlane.xlu0 %490
    %vm492 = vcmp.eq.f32.partialorder %v489, %v491
    %v493 = vsel %vm492, %v488, inf
    %494 = vmin.xlane.f32.xlu0 %v493
    %v495 = vpop.xlane.xlu0 %494
    %v496 = vcvt.f32.s32 %v495
    %v497 = vcvt.f32.s32 %v491
    %v498 = vshll.u32 %v497, 16
    %v499 = vadd.s32 %v498, %v496
    %v500 = vand.u32 %v289, 65535
    %v501 = vshra.s32 %v289, 16
    %v502 = vcvt.s32.f32 %v500
    %v503 = vcvt.s32.f32 %v501
    %504 = vmin.xlane.f32.xlu0 %v503
    %v505 = vpop.xlane.xlu0 %504
    %vm506 = vcmp.eq.f32.partialorder %v503, %v505
    %v507 = vsel %vm506, %v502, inf
    %508 = vmin.xlane.f32.xlu0 %v507
    %v509 = vpop.xlane.xlu0 %508
    %v510 = vcvt.f32.s32 %v509
    %v511 = vcvt.f32.s32 %v505
    %v512 = vshll.u32 %v511, 16
    %v513 = vadd.s32 %v512, %v510
    %vm514 = vcmp.eq.s32.totalorder %v225, %v303
    %vm515 = vcmp.eq.s32.totalorder %v225, %v317
    %vm516 = vcmp.eq.s32.totalorder %v225, %v331
    %vm517 = vcmp.eq.s32.totalorder %v225, %v345
    %vm518 = vcmp.eq.s32.totalorder %v225, %v359
    %vm519 = vcmp.eq.s32.totalorder %v225, %v373
    %vm520 = vcmp.eq.s32.totalorder %v225, %v387
    %vm521 = vcmp.eq.s32.totalorder %v225, %v401
    %vm522 = vcmp.eq.s32.totalorder %v225, %v415
    %vm523 = vcmp.eq.s32.totalorder %v225, %v429
    %vm524 = vcmp.eq.s32.totalorder %v225, %v443
    %vm525 = vcmp.eq.s32.totalorder %v225, %v457
    %vm526 = vcmp.eq.s32.totalorder %v225, %v471
    %vm527 = vcmp.eq.s32.totalorder %v225, %v485
    %vm528 = vcmp.eq.s32.totalorder %v225, %v499
    %vm529 = vcmp.eq.s32.totalorder %v225, %v513
    %v530 = vsel %vm514, 1, 0
    %v531 = vsel %vm515, 1, 0
    %v532 = vsel %vm516, 1, 0
    %v533 = vsel %vm517, 1, 0
    %v534 = vsel %vm518, 1, 0
    %v535 = vsel %vm519, 1, 0
    %v536 = vsel %vm520, 1, 0
    %v537 = vsel %vm521, 1, 0
    %v538 = vsel %vm522, 1, 0
    %v539 = vsel %vm523, 1, 0
    %v540 = vsel %vm524, 1, 0
    %v541 = vsel %vm525, 1, 0
    %v542 = vsel %vm526, 1, 0
    %v543 = vsel %vm527, 1, 0
    %v544 = vsel %vm528, 1, 0
    %v545 = vsel %vm529, 1, 0
    %v546 = vcvt.s32.f32 %v530
    %v547 = vcvt.s32.f32 %v531
    %v548 = vcvt.s32.f32 %v532
    %v549 = vcvt.s32.f32 %v533
    %v550 = vcvt.s32.f32 %v534
    %v551 = vcvt.s32.f32 %v535
    %v552 = vcvt.s32.f32 %v536
    %v553 = vcvt.s32.f32 %v537
    %v554 = vcvt.s32.f32 %v538
    %v555 = vcvt.s32.f32 %v539
    %v556 = vcvt.s32.f32 %v540
    %v557 = vcvt.s32.f32 %v541
    %v558 = vcvt.s32.f32 %v542
    %v559 = vcvt.s32.f32 %v543
    %v560 = vcvt.s32.f32 %v544
    %v561 = vcvt.s32.f32 %v545
    %v562 = vpack.c.bf16 %v547, %v546
    %v563 = vpack.c.bf16 %v549, %v548
    %v564 = vpack.c.bf16 %v551, %v550
    %v565 = vpack.c.bf16 %v553, %v552
    %v566 = vpack.c.bf16 %v555, %v554
    %v567 = vpack.c.bf16 %v557, %v556
    %v568 = vpack.c.bf16 %v559, %v558
    %v569 = vpack.c.bf16 %v561, %v560
    %v570 = vld [vmem:[%s2] sm:$0xf]
    %v571 = vld [vmem:[%s2 + $0x4] sm:$0xf]
    %v572 = vld [vmem:[%s2 + $0x8] sm:$0xf]
    %v573 = vld [vmem:[%s2 + $0xc] sm:$0xf]
    %v574 = vld [vmem:[%s2 + $0x10] sm:$0xf]
    %v575 = vld [vmem:[%s2 + $0x14] sm:$0xf]
    %v576 = vld [vmem:[%s2 + $0x18] sm:$0xf]
    %v577 = vld [vmem:[%s2 + $0x1c] sm:$0xf]
    %v578 = vld [vmem:[%s2 + $0x20] sm:$0xf]
    %v579 = vld [vmem:[%s2 + $0x24] sm:$0xf]
    %v580 = vld [vmem:[%s2 + $0x28] sm:$0xf]
    %v581 = vld [vmem:[%s2 + $0x2c] sm:$0xf]
    %v582 = vld [vmem:[%s2 + $0x30] sm:$0xf]
    %v583 = vld [vmem:[%s2 + $0x34] sm:$0xf]
    %v584 = vld [vmem:[%s2 + $0x38] sm:$0xf]
    %v585 = vld [vmem:[%s2 + $0x3c] sm:$0xf]
    %v586 = vld [vmem:[%s3] sm:$0xf]
    %v587 = vld [vmem:[%s3 + $0x4] sm:$0xf]
    %v588 = vld [vmem:[%s3 + $0x8] sm:$0xf]
    %v589 = vld [vmem:[%s3 + $0xc] sm:$0xf]
    %v590 = vld [vmem:[%s3 + $0x10] sm:$0xf]
    %v591 = vld [vmem:[%s3 + $0x14] sm:$0xf]
    %v592 = vld [vmem:[%s3 + $0x18] sm:$0xf]
    %v593 = vld [vmem:[%s3 + $0x1c] sm:$0xf]
    %v594 = vld [vmem:[%s3 + $0x20] sm:$0xf]
    %v595 = vld [vmem:[%s3 + $0x24] sm:$0xf]
    %v596 = vld [vmem:[%s3 + $0x28] sm:$0xf]
    %v597 = vld [vmem:[%s3 + $0x2c] sm:$0xf]
    %v598 = vld [vmem:[%s3 + $0x30] sm:$0xf]
    %v599 = vld [vmem:[%s3 + $0x34] sm:$0xf]
    %v600 = vld [vmem:[%s3 + $0x38] sm:$0xf]
    %v601 = vld [vmem:[%s3 + $0x3c] sm:$0xf]
    %v618 = vunpack.c.l.b16 %v586
    %v619 = vunpack.c.l.b16 %v587
    %v620 = vunpack.c.l.b16 %v588
    %v621 = vunpack.c.l.b16 %v589
    %v622 = vunpack.c.l.b16 %v590
    %v623 = vunpack.c.l.b16 %v591
    %v624 = vunpack.c.l.b16 %v592
    %v625 = vunpack.c.l.b16 %v593
    %v626 = vunpack.c.l.b16 %v594
    %v627 = vunpack.c.l.b16 %v595
    %v628 = vunpack.c.l.b16 %v596
    %v629 = vunpack.c.l.b16 %v597
    %v630 = vunpack.c.l.b16 %v598
    %v631 = vunpack.c.l.b16 %v599
    %v632 = vunpack.c.l.b16 %v600
    %v633 = vunpack.c.l.b16 %v601
    %v634 = vpack.c.b16 %v619, %v618
    %v635 = vpack.c.b16 %v621, %v620
    %v636 = vpack.c.b16 %v623, %v622
    %v637 = vpack.c.b16 %v625, %v624
    %v638 = vpack.c.b16 %v627, %v626
    %v639 = vpack.c.b16 %v629, %v628
    %v640 = vpack.c.b16 %v631, %v630
    %v641 = vpack.c.b16 %v633, %v632
    %650 = vmatpush.bf16.msra.mxu0 %v641
    %651 = vmatpush.bf16.msra.mxu0 %v640
    %652 = vmatpush.bf16.msra.mxu0 %v639
    %653 = vmatpush.bf16.msra.mxu0 %v638
    %654 = vmatpush.bf16.msra.mxu0 %v637
    %655 = vmatpush.bf16.msra.mxu0 %v636
    %656 = vmatpush.bf16.msra.mxu0 %v635
    %657 = vmatpush.bf16.msra.mxu0 %v634
    %658 = vmatmul.bf16.gmra.mxu0 %v562
    %v659 = vpop.f32.mrf.mxu0
    %v660 = vadd.f32 0.0, %v659
    %v661 = vpop.f32.mrf.mxu0
    %v662 = vadd.f32 0.0, %v661
    %663 = vmatmul.bf16.gmra.mxu0 %v563
    %v664 = vpop.f32.mrf.mxu0
    %v665 = vadd.f32 0.0, %v664
    %v666 = vpop.f32.mrf.mxu0
    %v667 = vadd.f32 0.0, %v666
    %668 = vmatmul.bf16.gmra.mxu0 %v564
    %v669 = vpop.f32.mrf.mxu0
    %v670 = vadd.f32 0.0, %v669
    %v671 = vpop.f32.mrf.mxu0
    %v672 = vadd.f32 0.0, %v671
    %673 = vmatmul.bf16.gmra.mxu0 %v565
    %v674 = vpop.f32.mrf.mxu0
    %v675 = vadd.f32 0.0, %v674
    %v676 = vpop.f32.mrf.mxu0
    %v677 = vadd.f32 0.0, %v676
    %678 = vmatmul.bf16.gmra.mxu0 %v566
    %v679 = vpop.f32.mrf.mxu0
    %v680 = vadd.f32 0.0, %v679
    %v681 = vpop.f32.mrf.mxu0
    %v682 = vadd.f32 0.0, %v681
    %683 = vmatmul.bf16.gmra.mxu0 %v567
    %v684 = vpop.f32.mrf.mxu0
    %v685 = vadd.f32 0.0, %v684
    %v686 = vpop.f32.mrf.mxu0
    %v687 = vadd.f32 0.0, %v686
    %688 = vmatmul.bf16.gmra.mxu0 %v568
    %v689 = vpop.f32.mrf.mxu0
    %v690 = vadd.f32 0.0, %v689
    %v691 = vpop.f32.mrf.mxu0
    %v692 = vadd.f32 0.0, %v691
    %693 = vmatmul.bf16.gmra.mxu0 %v569
    %v694 = vpop.f32.mrf.mxu0
    %v695 = vadd.f32 0.0, %v694
    %v696 = vpop.f32.mrf.mxu0
    %v697 = vadd.f32 0.0, %v696
    %698 = vdwg.mxu0
    %v715 = vunpack.c.l.b16 %v570
    %v716 = vunpack.c.l.b16 %v571
    %v717 = vunpack.c.l.b16 %v572
    %v718 = vunpack.c.l.b16 %v573
    %v719 = vunpack.c.l.b16 %v574
    %v720 = vunpack.c.l.b16 %v575
    %v721 = vunpack.c.l.b16 %v576
    %v722 = vunpack.c.l.b16 %v577
    %v723 = vunpack.c.l.b16 %v578
    %v724 = vunpack.c.l.b16 %v579
    %v725 = vunpack.c.l.b16 %v580
    %v726 = vunpack.c.l.b16 %v581
    %v727 = vunpack.c.l.b16 %v582
    %v728 = vunpack.c.l.b16 %v583
    %v729 = vunpack.c.l.b16 %v584
    %v730 = vunpack.c.l.b16 %v585
    %v731 = vpack.c.b16 %v716, %v715
    %v732 = vpack.c.b16 %v718, %v717
    %v733 = vpack.c.b16 %v720, %v719
    %v734 = vpack.c.b16 %v722, %v721
    %v735 = vpack.c.b16 %v724, %v723
    %v736 = vpack.c.b16 %v726, %v725
    %v737 = vpack.c.b16 %v728, %v727
    %v738 = vpack.c.b16 %v730, %v729
    %747 = vmatpush.bf16.msra.mxu0 %v738
    %748 = vmatpush.bf16.msra.mxu0 %v737
    %749 = vmatpush.bf16.msra.mxu0 %v736
    %750 = vmatpush.bf16.msra.mxu0 %v735
    %751 = vmatpush.bf16.msra.mxu0 %v734
    %752 = vmatpush.bf16.msra.mxu0 %v733
    %753 = vmatpush.bf16.msra.mxu0 %v732
    %754 = vmatpush.bf16.msra.mxu0 %v731
    %755 = vmatmul.bf16.gmra.mxu0 %v562
    %v756 = vpop.f32.mrf.mxu0
    %v757 = vadd.f32 %v660, %v756
    %v758 = vpop.f32.mrf.mxu0
    %v759 = vadd.f32 %v662, %v758
    %760 = vmatmul.bf16.gmra.mxu0 %v563
    %v761 = vpop.f32.mrf.mxu0
    %v762 = vadd.f32 %v665, %v761
    %v763 = vpop.f32.mrf.mxu0
    %v764 = vadd.f32 %v667, %v763
    %765 = vmatmul.bf16.gmra.mxu0 %v564
    %v766 = vpop.f32.mrf.mxu0
    %v767 = vadd.f32 %v670, %v766
    %v768 = vpop.f32.mrf.mxu0
    %v769 = vadd.f32 %v672, %v768
    %770 = vmatmul.bf16.gmra.mxu0 %v565
    %v771 = vpop.f32.mrf.mxu0
    %v772 = vadd.f32 %v675, %v771
    %v773 = vpop.f32.mrf.mxu0
    %v774 = vadd.f32 %v677, %v773
    %775 = vmatmul.bf16.gmra.mxu0 %v566
    %v776 = vpop.f32.mrf.mxu0
    %v777 = vadd.f32 %v680, %v776
    %v778 = vpop.f32.mrf.mxu0
    %v779 = vadd.f32 %v682, %v778
    %780 = vmatmul.bf16.gmra.mxu0 %v567
    %v781 = vpop.f32.mrf.mxu0
    %v782 = vadd.f32 %v685, %v781
    %v783 = vpop.f32.mrf.mxu0
    %v784 = vadd.f32 %v687, %v783
    %785 = vmatmul.bf16.gmra.mxu0 %v568
    %v786 = vpop.f32.mrf.mxu0
    %v787 = vadd.f32 %v690, %v786
    %v788 = vpop.f32.mrf.mxu0
    %v789 = vadd.f32 %v692, %v788
    %790 = vmatmul.bf16.gmra.mxu0 %v569
    %v791 = vpop.f32.mrf.mxu0
    %v792 = vadd.f32 %v695, %v791
    %v793 = vpop.f32.mrf.mxu0
    %v794 = vadd.f32 %v697, %v793
    %795 = vdwg.mxu0
    %796 = vst.msk [vmem:[%s64] sm:$0xff] %vm114, %v757
    %797 = vst.msk [vmem:[%s64 + $0x8] sm:$0xff] %vm114, %v759
    %798 = vst.msk [vmem:[%s64 + $0x10] sm:$0xff] %vm114, %v762
    %799 = vst.msk [vmem:[%s64 + $0x18] sm:$0xff] %vm114, %v764
    %800 = vst.msk [vmem:[%s64 + $0x20] sm:$0xff] %vm114, %v767
    %801 = vst.msk [vmem:[%s64 + $0x28] sm:$0xff] %vm114, %v769
    %802 = vst.msk [vmem:[%s64 + $0x30] sm:$0xff] %vm114, %v772
    %803 = vst.msk [vmem:[%s64 + $0x38] sm:$0xff] %vm114, %v774
    %804 = vst.msk [vmem:[%s64 + $0x40] sm:$0xff] %vm114, %v777
    %805 = vst.msk [vmem:[%s64 + $0x48] sm:$0xff] %vm114, %v779
    %806 = vst.msk [vmem:[%s64 + $0x50] sm:$0xff] %vm114, %v782
    %807 = vst.msk [vmem:[%s64 + $0x58] sm:$0xff] %vm114, %v784
    %808 = vst.msk [vmem:[%s64 + $0x60] sm:$0xff] %vm114, %v787
    %809 = vst.msk [vmem:[%s64 + $0x68] sm:$0xff] %vm114, %v789
    %810 = vst.msk [vmem:[%s64 + $0x70] sm:$0xff] %vm114, %v792
    %811 = vst.msk [vmem:[%s64 + $0x78] sm:$0xff] %vm114, %v794
    %v812 = vld [vmem:[%s5] sm:$0x1]
    %813 = vmatpush.bf16.xpose.msra.mxu0 %v569
    %814 = vmatpush.bf16.xpose.msra.mxu0 %v568
    %815 = vmatpush.bf16.xpose.msra.mxu0 %v567
    %816 = vmatpush.bf16.xpose.msra.mxu0 %v566
    %817 = vmatpush.bf16.xpose.msra.mxu0 %v565
    %818 = vmatpush.bf16.xpose.msra.mxu0 %v564
    %819 = vmatpush.bf16.xpose.msra.mxu0 %v563
    %820 = vmatpush.bf16.xpose.msra.mxu0 %v562
    %821 = vmatmul.bf16.gmra.mxu0 %v812
    %v822 = vpop.f32.mrf.mxu0
    %v823 = vadd.f32 0.0, %v822
    %v824 = vpop.f32.mrf.mxu0
    %825 = vdwg.mxu0
    %v826 = vmul.f32 %v823, 256.0
    %v828 = vrot.slane %v826, 1
    %v830 = vadd.f32 %v823, %v828
    %v831 = vadd.f32 %v830, 0.5
    %v832 = vcvt.f32.s32.to.zero.pseudo %v831
    %833 = vst [vmem:[%s70] sm:$0x1] %v832
    %v834 = vlaneseq
    %v835 = vshrl.u32 %v834, 7
    %v836 = vadd.s32 %v835, 8
    %v837 = vadd.s32 %v835, 16
    %v838 = vadd.s32 %v835, 24
    %v839 = vadd.s32 %v835, 32
    %v840 = vadd.s32 %v835, 40
    %v841 = vadd.s32 %v835, 48
    %v842 = vadd.s32 %v835, 56
    %v843 = vadd.s32 %v835, 64
    %v844 = vadd.s32 %v835, 72
    %v845 = vadd.s32 %v835, 80
    %v846 = vadd.s32 %v835, 88
    %v847 = vadd.s32 %v835, 96
    %v848 = vadd.s32 %v835, 104
    %v849 = vadd.s32 %v835, 112
    %v850 = vadd.s32 %v835, 120
    %s851 = smul.u32 %s73, 128
    %v852 = vstv %s851
    %v853 = vadd.s32 %v835, %v852
    %v854 = vadd.s32 %v836, %v852
    %v855 = vadd.s32 %v837, %v852
    %v856 = vadd.s32 %v838, %v852
    %v857 = vadd.s32 %v839, %v852
    %v858 = vadd.s32 %v840, %v852
    %v859 = vadd.s32 %v841, %v852
    %v860 = vadd.s32 %v842, %v852
    %v861 = vadd.s32 %v843, %v852
    %v862 = vadd.s32 %v844, %v852
    %v863 = vadd.s32 %v845, %v852
    %v864 = vadd.s32 %v846, %v852
    %v865 = vadd.s32 %v847, %v852
    %v866 = vadd.s32 %v848, %v852
    %v867 = vadd.s32 %v849, %v852
    %v868 = vadd.s32 %v850, %v852
    %vm869 = vcmp.lt.s32.totalorder %v853, 16
    %vm870 = vcmp.lt.s32.totalorder %v854, 16
    %vm871 = vcmp.lt.s32.totalorder %v855, 16
    %vm872 = vcmp.lt.s32.totalorder %v856, 16
    %vm873 = vcmp.lt.s32.totalorder %v857, 16
    %vm874 = vcmp.lt.s32.totalorder %v858, 16
    %vm875 = vcmp.lt.s32.totalorder %v859, 16
    %vm876 = vcmp.lt.s32.totalorder %v860, 16
    %vm877 = vcmp.lt.s32.totalorder %v861, 16
    %vm878 = vcmp.lt.s32.totalorder %v862, 16
    %vm879 = vcmp.lt.s32.totalorder %v863, 16
    %vm880 = vcmp.lt.s32.totalorder %v864, 16
    %vm881 = vcmp.lt.s32.totalorder %v865, 16
    %vm882 = vcmp.lt.s32.totalorder %v866, 16
    %vm883 = vcmp.lt.s32.totalorder %v867, 16
    %vm884 = vcmp.lt.s32.totalorder %v868, 16
    %v885 = vsel %vm869, 1, 0
    %v886 = vsel %vm870, 1, 0
    %v887 = vsel %vm871, 1, 0
    %v888 = vsel %vm872, 1, 0
    %v889 = vsel %vm873, 1, 0
    %v890 = vsel %vm874, 1, 0
    %v891 = vsel %vm875, 1, 0
    %v892 = vsel %vm876, 1, 0
    %v893 = vsel %vm877, 1, 0
    %v894 = vsel %vm878, 1, 0
    %v895 = vsel %vm879, 1, 0
    %v896 = vsel %vm880, 1, 0
    %v897 = vsel %vm881, 1, 0
    %v898 = vsel %vm882, 1, 0
    %v899 = vsel %vm883, 1, 0
    %v900 = vsel %vm884, 1, 0
    %v901 = vcvt.s32.f32 %v885
    %v902 = vcvt.s32.f32 %v886
    %v903 = vcvt.s32.f32 %v887
    %v904 = vcvt.s32.f32 %v888
    %v905 = vcvt.s32.f32 %v889
    %v906 = vcvt.s32.f32 %v890
    %v907 = vcvt.s32.f32 %v891
    %v908 = vcvt.s32.f32 %v892
    %v909 = vcvt.s32.f32 %v893
    %v910 = vcvt.s32.f32 %v894
    %v911 = vcvt.s32.f32 %v895
    %v912 = vcvt.s32.f32 %v896
    %v913 = vcvt.s32.f32 %v897
    %v914 = vcvt.s32.f32 %v898
    %v915 = vcvt.s32.f32 %v899
    %v916 = vcvt.s32.f32 %v900
    %v917 = vsub.f32 %v74, %v757
    %v918 = vsub.f32 %v75, %v759
    %v919 = vsub.f32 %v76, %v762
    %v920 = vsub.f32 %v77, %v764
    %v921 = vsub.f32 %v78, %v767
    %v922 = vsub.f32 %v79, %v769
    %v923 = vsub.f32 %v80, %v772
    %v924 = vsub.f32 %v81, %v774
    %v925 = vsub.f32 %v82, %v777
    %v926 = vsub.f32 %v83, %v779
    %v927 = vsub.f32 %v84, %v782
    %v928 = vsub.f32 %v85, %v784
    %v929 = vsub.f32 %v86, %v787
    %v930 = vsub.f32 %v87, %v789
    %v931 = vsub.f32 %v88, %v792
    %v932 = vsub.f32 %v89, %v794
    %v933 = vmul.f32 %v917, %v901
    %v934 = vmul.f32 %v918, %v902
    %v935 = vmul.f32 %v919, %v903
    %v936 = vmul.f32 %v920, %v904
    %v937 = vmul.f32 %v921, %v905
    %v938 = vmul.f32 %v922, %v906
    %v939 = vmul.f32 %v923, %v907
    %v940 = vmul.f32 %v924, %v908
    %v941 = vmul.f32 %v925, %v909
    %v942 = vmul.f32 %v926, %v910
    %v943 = vmul.f32 %v927, %v911
    %v944 = vmul.f32 %v928, %v912
    %v945 = vmul.f32 %v929, %v913
    %v946 = vmul.f32 %v930, %v914
    %v947 = vmul.f32 %v931, %v915
    %v948 = vmul.f32 %v932, %v916
    %v949 = vmul.f32 %v933, %v933
    %v950 = vmul.f32 %v934, %v934
    %v951 = vmul.f32 %v935, %v935
    %v952 = vmul.f32 %v936, %v936
    %v953 = vmul.f32 %v937, %v937
    %v954 = vmul.f32 %v938, %v938
    %v955 = vmul.f32 %v939, %v939
    %v956 = vmul.f32 %v940, %v940
    %v957 = vmul.f32 %v941, %v941
    %v958 = vmul.f32 %v942, %v942
    %v959 = vmul.f32 %v943, %v943
    %v960 = vmul.f32 %v944, %v944
    %v961 = vmul.f32 %v945, %v945
    %v962 = vmul.f32 %v946, %v946
    %v963 = vmul.f32 %v947, %v947
    %v964 = vmul.f32 %v948, %v948
    %v965 = vsel %vm114, %v949, 0.0
    %v966 = vsel %vm114, %v950, 0.0
    %v967 = vadd.f32 %v965, %v966
    %v968 = vsel %vm114, %v951, 0.0
    %v969 = vadd.f32 %v967, %v968
    %v970 = vsel %vm114, %v952, 0.0
    %v971 = vadd.f32 %v969, %v970
    %v972 = vsel %vm114, %v953, 0.0
    %v973 = vadd.f32 %v971, %v972
    %v974 = vsel %vm114, %v954, 0.0
    %v975 = vadd.f32 %v973, %v974
    %v976 = vsel %vm114, %v955, 0.0
    %v977 = vadd.f32 %v975, %v976
    %v978 = vsel %vm114, %v956, 0.0
    %v979 = vadd.f32 %v977, %v978
    %v980 = vsel %vm114, %v957, 0.0
    %v981 = vadd.f32 %v979, %v980
    %v982 = vsel %vm114, %v958, 0.0
    %v983 = vadd.f32 %v981, %v982
    %v984 = vsel %vm114, %v959, 0.0
    %v985 = vadd.f32 %v983, %v984
    %v986 = vsel %vm114, %v960, 0.0
    %v987 = vadd.f32 %v985, %v986
    %v988 = vsel %vm114, %v961, 0.0
    %v989 = vadd.f32 %v987, %v988
    %v990 = vsel %vm114, %v962, 0.0
    %v991 = vadd.f32 %v989, %v990
    %v992 = vsel %vm114, %v963, 0.0
    %v993 = vadd.f32 %v991, %v992
    %v994 = vsel %vm114, %v964, 0.0
    %v995 = vadd.f32 %v993, %v994
    %996 = vadd.xlane.f32.xlu0 %v995
    %v997 = vpop.xlane.xlu0 %996
    %v998 = vrot.slane %v997, 4
    %v999 = vadd.f32 %v997, %v998
    %v1000 = vrot.slane %v999, 2
    %v1001 = vadd.f32 %v999, %v1000
    %v1002 = vrot.slane %v1001, 1
    %v1003 = vadd.f32 %v1001, %v1002
    %s1004 = vtos %v1003
    %p1005 = scmp.eq.s32.totalorder 0, 0
    // Predicated region
    $region26: #{vector_quantizer_forward.1} parent=1 // pred_check
      %p1006 = pneg %p1005
    $region27: #{vector_quantizer_forward.1} parent=1 // pred_check_branch
      %1008 = sbr.rel (%p1006) target = $region29
    $region28: #{vector_quantizer_forward.1} parent=1 // pred_region
      %vm1009 = vcmask 0
      %1010 = vst.msk [vmem:[#allocation2] sm:$0x1] %vm1009, 0.0
    $region29: #{vector_quantizer_forward.1} parent=1 // pred_fallthru
      _
    %v1011 = vld [vmem:[#allocation2] sm:$0x1]
    %v1012 = vstv %s1004
    %v1013 = vadd.f32 %v1011, %v1012
    %vm1014 = vcmask 0
    %1015 = vst.msk [vmem:[#allocation2] sm:$0x1] %vm1014, %v1013
    // Predicated region
    $region30: #{vector_quantizer_forward.1} parent=1 // pred_check
      %p1016 = pneg %p1005
    $region31: #{vector_quantizer_forward.1} parent=1 // pred_check_branch
      %1018 = sbr.rel (%p1016) target = $region33
    $region32: #{vector_quantizer_forward.1} parent=1 // pred_region
      %v1019 = vld [vmem:[#allocation2] sm:$0x1]
      %v1020 = vmul.f32 %v1019, 0.0024414063
      %1021 = vst.msk [vmem:[#allocation2] sm:$0x1] %vm1014, %v1020
    $region33: #{vector_quantizer_forward.1} parent=1 // pred_fallthru
      _
    %s1022 = sadd.s32 0, 0
    %s1023 = smul.u32 16, %s1022
    %p1024 = scmp.lt.s32.totalorder %s1023, 15
    %s1025 = scalar_select %p1024, %s1023, 15
    %s1026 = smul.addr %s1025, 8
    %s1027 = scalar_lea.vmem %s6, %s1026
    %s1028 = sadd.s32 0, 0
    %p1029 = scmp.lt.s32.totalorder %s1028, 0
    %s1030 = scalar_select %p1029, %s1028, 0
    %s1031 = scalar_lea.vmem %s7, %s1030
    // Predicated region
    $region34: #{vector_quantizer_forward.1} parent=1 // pred_check
      _
    $region35: #{vector_quantizer_forward.1} parent=1 // pred_check_branch
      %1033 = sbr.rel (0) target = $region37
    $region36: #{vector_quantizer_forward.1} parent=1 // pred_region
      %s1034 = sadd.s32 0, 0
      %s1035 = smul.u32 16, %s1034
    $region37: #{vector_quantizer_forward.1} parent=1 // pred_fallthru
      _
    // Predicated region
    $region38: #{vector_quantizer_forward.1} parent=1 // pred_check
      _
    $region39: #{vector_quantizer_forward.1} parent=1 // pred_check_branch
      %1037 = sbr.rel (0) target = $region41
    $region40: #{vector_quantizer_forward.1} parent=1 // pred_region
      %s1038 = sadd.s32 0, 0
    $region41: #{vector_quantizer_forward.1} parent=1 // pred_fallthru
      _
    // Predicated region
    $region42: #{vector_quantizer_forward.1} parent=1 // pred_check
      _
    $region43: #{vector_quantizer_forward.1} parent=1 // pred_check_branch
      %1040 = sbr.rel (0) target = $region45
    $region44: #{vector_quantizer_forward.1} parent=1 // pred_region
      %1042 = vsyncadd [#allocation3], 0
      %s1044 = sshll.u32 [#allocation2], 4
      %s1045 = int_to_ptr.vmem [resolvable:$true] %s1044
      %s1046 = sshll.u32 %s8, 4
      %s1047 = int_to_ptr.hbm [resolvable:$true] %s1046
      %1049 = dma.vmem_to_hbm [thread:$0]  %s1045, 16, %s1047, [#allocation3]
    $region45: #{vector_quantizer_forward.1} parent=1 // pred_fallthru
      _
    // Predicated region
    $region46: #{vector_quantizer_forward.1} parent=1 // pred_check
      _
    $region47: #{vector_quantizer_forward.1} parent=1 // pred_check_branch
      %1051 = sbr.rel (0) target = $region49
    $region48: #{vector_quantizer_forward.1} parent=1 // pred_region
      %s1052 = sadd.s32 0, 0
      %s1053 = smul.u32 16, %s1052
      %p1054 = scmp.lt.s32.totalorder %s1053, 15
      %s1055 = scalar_select %p1054, %s1053, 15
      %s1056 = smul.addr %s1055, 8
      %s1057 = scalar_lea.vmem %s6, %s1056
    $region49: #{vector_quantizer_forward.1} parent=1 // pred_fallthru
      _
    // Predicated region
    $region50: #{vector_quantizer_forward.1} parent=1 // pred_check
      _
    $region51: #{vector_quantizer_forward.1} parent=1 // pred_check_branch
      %1059 = sbr.rel (0) target = $region53
    $region52: #{vector_quantizer_forward.1} parent=1 // pred_region
      %s1060 = sadd.s32 0, 0
      %p1061 = scmp.lt.s32.totalorder %s1060, 0
      %s1062 = scalar_select %p1061, %s1060, 0
      %s1063 = scalar_lea.vmem %s7, %s1062
    $region53: #{vector_quantizer_forward.1} parent=1 // pred_fallthru
      _
    // Predicated region
    $region54: #{vector_quantizer_forward.1} parent=1 // pred_check
      _
    $region55: #{vector_quantizer_forward.1} parent=1 // pred_check_branch
      %1065 = sbr.rel (0) target = $region57
    $region56: #{vector_quantizer_forward.1} parent=1 // pred_region
      %1067 = dma.done [#allocation3], 16
    $region57: #{vector_quantizer_forward.1} parent=1 // pred_fallthru
      _
    %1068 = vsyncpa [#allocation3], 1

</llo_original>
